<compile_context>
chip_gen: v6e
topology: v6e:2x2x1
jax: 0.10.0
libtpu: 0.0.40
codegen_flags: <defaults>
</compile_context>

<pallas_src>
import jax
import jax.numpy as jnp
import numpy as np
from jax import lax
from jax.experimental import pallas as pl
from jax.experimental.pallas import tpu as pltpu


def _round_up(x, m):
    return ((x + m - 1) // m) * m


def _make_finn_kernel(tb, nx, nx_pad):
    """Build the Euler-block kernel: one grid step == `tb` Euler time steps."""

    def kernel(dt_ref, p_ref, u0_ref, out_ref, state_ref):
        blk = pl.program_id(0)

        # Initialize the carried state with u0 on the first grid step.
        @pl.when(blk == 0)
        def _():
            state_ref[...] = u0_ref[...]

        # --- per-block (NOT per-step) setup: scalars, masks, folded coeffs ---
        bc0 = p_ref[0]     # top Dirichlet BC value
        tcc = p_ref[1]     # (D/dx^2 + relu(v)/dx) * stencil[0]   (top flux, self)
        tpc = p_ref[2]     # (D/dx^2 + relu(v)/dx) * stencil[1]   (top flux, upper nbr)
        bcc = p_ref[3]     # (D/dx^2 - (-relu(-v))/dx) * stencil[0]  (bot flux, self)
        bnc = p_ref[4]     # (D/dx^2 - (-relu(-v))/dx) * stencil[1]  (bot flux, lower nbr)
        fhc = p_ref[5]     # -alpha*rho_s/n_e*(1-f)*k_d
        rtc = p_ref[6]     # f*k_d*beta*rho_s/n_e
        ghc = p_ref[7]     # alpha*rho_s/n_e
        ner = p_ref[8]     # n_e/rho_s
        bm1 = p_ref[9]     # beta - 1   (kept as a scalar exponent)

        shape = (1, nx_pad)
        f32 = jnp.float32
        lane = lax.broadcasted_iota(jnp.int32, shape, 1)
        is_top = lane == 0
        is_bot = lane == (nx - 1)
        is_real = lane < nx                # padded lanes are frozen (coeffs = 0)
        zero = jnp.zeros(shape, f32)

        # Linear part of flux_c folded to: diag*c + up*c_prev + dn*c_next + add
        # (no per-step selects; padded lanes get all-zero coefficients).
        diag_v = jnp.where(is_real, jnp.where(is_bot, tcc, tcc + bcc), zero)
        up_v = jnp.where(jnp.logical_and(is_real, jnp.logical_not(is_top)), tpc, zero)
        dn_v = jnp.where(jnp.logical_and(is_real, jnp.logical_not(is_bot)), bnc, zero)
        top_add_v = jnp.where(is_top, tpc * bc0, zero)
        fhc_v = jnp.where(is_real, fhc, zero)
        ghc_v = jnp.where(is_real, ghc, zero)
        rtc_v = jnp.full(shape, rtc, f32)
        ner_v = jnp.full(shape, ner, f32)

        c0 = state_ref[0:1, :]
        sk0 = state_ref[1:2, :]
        blk_off = blk * tb

        # --- TB Euler steps, fully unrolled --------------------------------
        def step(i, carry):
            c, sk = carry
            # odeint returns the state AT each time index -> store first.
            out_ref[0, pl.ds(i, 1), :] = c
            out_ref[1, pl.ds(i, 1), :] = sk

            dt = dt_ref[blk_off + i]

            # Neighbor access via XLU lane rotation; boundary/padded lanes are
            # neutralized by the zeroed coefficient vectors above.
            c_prev = pltpu.roll(c, 1, 1)            # c_prev[i] = c[i-1]
            c_next = pltpu.roll(c, nx_pad - 1, 1)   # c_next[i] = c[i+1]
            lin = diag_v * c + up_v * c_prev + dn_v * c_next + top_add_v

            # Freundlich isotherm: c**(beta-1) as exp/log (EUP-only chain).
            c_pow = jnp.exp(bm1 * jnp.log(c))
            f_hyd = fhc_v * c_pow
            g_hyd = ghc_v * sk
            sorp = f_hyd * c + g_hyd
            ret = rtc_v * c_pow + 1.0

            r = pl.reciprocal(ret, approx=True)
            r = r * (2.0 - ret * r)                 # one Newton refinement

            flux_c = (lin + sorp) * r
            flux_sk = -sorp * ner_v

            # Explicit Euler update (dt of the last / padded steps is 0).
            return (c + dt * flux_c, sk + dt * flux_sk)

        c_fin, sk_fin = lax.fori_loop(0, tb, step, (c0, sk0), unroll=True)

        # Persist the carried state for the next grid block (two slice stores).
        state_ref[0:1, :] = c_fin
        state_ref[1:2, :] = sk_fin

    return kernel


def finn_diffad2ss_forward(u, t, params, time_block=32):
    """u: (Nx, 1, 2) like the torch module's input; t: (T,). Returns (Nx, T, 2)."""
    nx = u.shape[0]
    tsteps = t.shape[0]

    # Lane-dense padding of the space axis (multiple of 128 lanes).
    nx_pad = max(128, _round_up(nx, 128))
    # Time blocking: TB Euler steps per grid iteration; TB multiple of 8 so the
    # (2, TB, Nx_pad) output tile is sublane/lane dense.
    time_block = max(8, (int(time_block) // 8) * 8)
    tb = min(time_block, _round_up(max(tsteps, 1), 8))
    n_blocks = (tsteps + tb - 1) // tb
    t_pad = n_blocks * tb

    # Initial state, padded. Padded c lanes get 1.0 so log/exp stays finite
    # there; those lanes are frozen in-kernel (zero coefficients) and discarded.
    c0 = u[:, 0, 0].astype(jnp.float32)
    sk0 = u[:, 0, 1].astype(jnp.float32)
    c0p = jnp.concatenate([c0, jnp.ones((nx_pad - nx,), jnp.float32)])
    sk0p = jnp.concatenate([sk0, jnp.zeros((nx_pad - nx,), jnp.float32)])
    u0 = jnp.stack([c0p, sk0p], axis=0)                                 # (2, Nx_pad)

    # Per-step dt; dt of the last real step and of padded steps is 0.
    dt_core = (t[1:] - t[:-1]).astype(jnp.float32)
    dt = jnp.concatenate(
        [dt_core, jnp.zeros((t_pad - tsteps + 1,), jnp.float32)])        # (T_pad,)

    # Fold scalar constants host-side (sigmoid/abs transforms already applied
    # by the caller, matching the module's flux_kernel).
    D = float(params["D"]); dx = float(params["dx"]); bc0 = float(params["BC0"])
    v_e = float(params["v_e"]); rho_s = float(params["rho_s"]); n_e = float(params["n_e"])
    alpha = float(params["alpha"]); k_d = float(params["k_d"])
    beta = float(params["beta"]); f = float(params["f"])
    s0 = float(params["s0"]); s1 = float(params["s1"])

    a_plus = max(v_e, 0.0)        # th.relu(v)
    a_min = -max(-v_e, 0.0)       # -th.relu(-v)
    ct = D / dx**2 + a_plus / dx  # top-flux common factor
    cb = D / dx**2 - a_min / dx   # bot-flux common factor
    p = jnp.array(
        [bc0,
         ct * s0, ct * s1,
         cb * s0, cb * s1,
         -alpha * rho_s / n_e * (1.0 - f) * k_d,   # f_hyd coefficient
         f * k_d * beta * rho_s / n_e,             # retardation coefficient
         alpha * rho_s / n_e,                      # g_hyd coefficient
         n_e / rho_s,
         beta - 1.0],
        dtype=jnp.float32)                                                # (10,)

    # TODO(synk): for very long horizons (T in the tens of thousands), block the
    # dt input per grid step instead of keeping the full (T_pad,) array in SMEM.
    out = pl.pallas_call(
        _make_finn_kernel(tb, nx, nx_pad),
        out_shape=jax.ShapeDtypeStruct((2, t_pad, nx_pad), jnp.float32),
        grid=(n_blocks,),
        in_specs=[
            pl.BlockSpec(memory_space=pltpu.MemorySpace.SMEM),   # dt (T_pad,)
            pl.BlockSpec(memory_space=pltpu.MemorySpace.SMEM),   # params (10,)
            pl.BlockSpec((2, nx_pad), lambda b: (0, 0)),         # u0 (full block)
        ],
        out_specs=pl.BlockSpec((2, tb, nx_pad), lambda b: (0, b, 0)),
        scratch_shapes=[pltpu.VMEM((2, nx_pad), jnp.float32)],   # carried state
        compiler_params=pltpu.CompilerParams(
            dimension_semantics=("arbitrary",)),                  # time is serial
    )(dt, p, u0)

    # TODO(synk): for Nx >> 128, repack the space axis as (Nx/128, 128)
    # sublanes x lanes (lane roll + sublane-edge fixup) to use full vregs.
    # Strip padding; (2, T, Nx) -> (Nx, T, 2) to match PyTorch pred.transpose(0, 1).
    return jnp.transpose(out[:, :tsteps, :nx], (2, 1, 0))


def reference_forward(u, t, p):
    """Pure numpy reference of the PyTorch forward (euler odeint of flux_kernel)."""
    u_np = np.asarray(u, dtype=np.float64)
    t_np = np.asarray(t, dtype=np.float64)
    nx, tsteps = u_np.shape[0], t_np.shape[0]
    D, dx, bc0, v_e = p["D"], p["dx"], p["BC0"], p["v_e"]
    rho_s, n_e, alpha, k_d = p["rho_s"], p["n_e"], p["alpha"], p["k_d"]
    beta, f, s0, s1 = p["beta"], p["f"], p["s0"], p["s1"]
    a_plus = max(v_e, 0.0)
    a_min = -max(-v_e, 0.0)

    def flux(y):
        c, sk = y[:, 0], y[:, 1]
        top = np.empty(nx)
        bot = np.empty(nx)
        top[0] = D / dx**2 * (s0 * c[0] + s1 * bc0) \
            - a_plus / dx * (-s0 * c[0] - s1 * bc0)
        top[1:] = D / dx**2 * (s0 * c[1:] + s1 * c[:-1]) \
            - a_plus / dx * (-s0 * c[1:] - s1 * c[:-1])
        bot[:-1] = D / dx**2 * (s0 * c[:-1] + s1 * c[1:]) \
            - a_min / dx * (s0 * c[:-1] + s1 * c[1:])
        bot[-1] = 0.0
        c_pow = np.power(c, beta - 1.0)
        f_hyd = -alpha * rho_s / n_e * (1.0 - f) * (k_d * c_pow)
        ret = f * (k_d * beta * c_pow) * (rho_s / n_e) + 1.0
        g_hyd = alpha * rho_s / n_e * sk
        flux_c = (top + bot + f_hyd * c + g_hyd) / ret
        flux_sk = -f_hyd * (n_e / rho_s) * c - g_hyd * (n_e / rho_s)
        return np.stack([flux_c, flux_sk], axis=-1)

    y = u_np[:, 0, :].copy()
    preds = []
    for k in range(tsteps):
        preds.append(y.copy())
        if k < tsteps - 1:
            y = y + (t_np[k + 1] - t_np[k]) * flux(y)
    pred = np.stack(preds, axis=0)          # (T, Nx, 2)
    return np.transpose(pred, (1, 0, 2))    # (Nx, T, 2)


if __name__ == "__main__":
    sigmoid = lambda x: 1.0 / (1.0 + np.exp(-x))

    Nx, T = 16, 8                 # x_steps_soil, t_steps (small synthetic sizes)
    key = jax.random.PRNGKey(0)
    k1, k2 = jax.random.split(key)
    c0 = jax.random.uniform(k1, (Nx,), minval=0.2, maxval=1.0)
    sk0 = jax.random.uniform(k2, (Nx,), minval=0.01, maxval=0.1)
    u = jnp.stack([c0, sk0], axis=-1)[:, None, :].astype(jnp.float32)   # (Nx, 1, 2)
    t = jnp.linspace(0.0, 0.07, T).astype(jnp.float32)                  # (T,)

    # Deterministic parameter init mirroring the module's __init__ / flux_kernel
    # transforms (learn_f / learn_beta store logits -> sigmoid; alpha/k_d -> abs).
    D = 5e-4                       # dispersion (learn_coeff=True, just init)
    dx = 0.05
    BC = np.array([[1.0]], dtype=np.float32)   # top Dirichlet BC
    rho_s, n_e, v_e = 1.5, 0.4, 0.01
    f_raw = -np.log(1.0 / 0.5 - 1.0)           # learn_f=True  -> stored logit
    beta_raw = -np.log(1.0 / 0.8 - 1.0)        # learn_beta=True -> stored logit
    alpha_raw = 1e-3                           # learn_alpha=True -> abs()
    k_d_raw = 0.5                              # learn_k_d=True  -> abs()
    stencil = np.array([-1.0, 1.0], dtype=np.float32)

    params = dict(
        D=D, dx=dx, BC0=float(BC[0, 0]), v_e=v_e, rho_s=rho_s, n_e=n_e,
        alpha=abs(alpha_raw), k_d=abs(k_d_raw),
        beta=float(sigmoid(beta_raw)), f=float(sigmoid(f_raw)),
        s0=float(stencil[0]), s1=float(stencil[1]),
    )
    # TODO(synk): sand=True branch and learn_{f,r,g}_hyd MLP branches of
    # flux_kernel are not exercised in this configuration.

    pred = finn_diffad2ss_forward(u, t, params)
    pred = jax.block_until_ready(pred)

    ref = reference_forward(np.asarray(u), np.asarray(t), params)
    assert pred.shape == (Nx, T, 2)
    # Newton-refined reciprocal + exp/log pow keep the f32 kernel well inside
    # this tolerance vs. the float64 reference.
    np.testing.assert_allclose(np.asarray(pred), ref, rtol=1e-3, atol=1e-5)

    print("KERNEL_OK")
</pallas_src>

<mosaic_0001>
module attributes {stable_mosaic.version = 11 : i64} {
  func.func @kernel(%arg0: i32, %arg1: memref<8xf32, #tpu.memory_space<smem>>, %arg2: memref<10xf32, #tpu.memory_space<smem>>, %arg3: memref<2x128xf32, #tpu.memory_space<vmem>>, %arg4: memref<2x8x128xf32, #tpu.memory_space<vmem>>, %arg5: memref<2x128xf32, #tpu.memory_space<vmem>>) attributes {dimension_semantics = [#tpu.dimension_semantics<arbitrary>], iteration_bounds = array<i64: 1>, scalar_prefetch = 0 : i64, scratch_operands = 1 : i64, tpu.core_type = #tpu.core_type<tc>, window_params = [{transform_indices = @transform_0, window_bounds = array<i64: 8>}, {transform_indices = @transform_1, window_bounds = array<i64: 10>}, {pipeline_mode = #tpu.pipeline_mode<synchronous>, transform_indices = @transform_2, window_bounds = array<i64: 2, 128>}, {transform_indices = @transform_3, window_bounds = array<i64: 2, 8, 128>}]} {
    %c0_i32 = arith.constant 0 : i32
    %0 = arith.cmpi eq, %arg0, %c0_i32 : i32
    %1 = arith.extui %0 : i1 to i32
    %c0_i32_0 = arith.constant 0 : i32
    %2 = arith.cmpi ne, %1, %c0_i32_0 : i32
    scf.if %2 {
      %c0_85 = arith.constant 0 : index
      %c0_86 = arith.constant 0 : index
      %416 = vector.load %arg3[%c0_85, %c0_86] : memref<2x128xf32, #tpu.memory_space<vmem>>, vector<2x128xf32>
      %c0_87 = arith.constant 0 : index
      %c0_88 = arith.constant 0 : index
      %417 = vector.load %arg5[%c0_87, %c0_88] : memref<2x128xf32, #tpu.memory_space<vmem>>, vector<2x128xf32>
      tpu.vector_store %arg5[%c0_87, %c0_88], %416 {strides = array<i32>} : memref<2x128xf32, #tpu.memory_space<vmem>>, vector<2x128xf32>,
    } else {
    }
    %c0 = arith.constant 0 : index
    %3 = memref.load %arg2[%c0] : memref<10xf32, #tpu.memory_space<smem>>
    %c1 = arith.constant 1 : index
    %4 = memref.load %arg2[%c1] : memref<10xf32, #tpu.memory_space<smem>>
    %c2 = arith.constant 2 : index
    %5 = memref.load %arg2[%c2] : memref<10xf32, #tpu.memory_space<smem>>
    %c3 = arith.constant 3 : index
    %6 = memref.load %arg2[%c3] : memref<10xf32, #tpu.memory_space<smem>>
    %c4 = arith.constant 4 : index
    %7 = memref.load %arg2[%c4] : memref<10xf32, #tpu.memory_space<smem>>
    %c5 = arith.constant 5 : index
    %8 = memref.load %arg2[%c5] : memref<10xf32, #tpu.memory_space<smem>>
    %c6 = arith.constant 6 : index
    %9 = memref.load %arg2[%c6] : memref<10xf32, #tpu.memory_space<smem>>
    %c7 = arith.constant 7 : index
    %10 = memref.load %arg2[%c7] : memref<10xf32, #tpu.memory_space<smem>>
    %c8 = arith.constant 8 : index
    %11 = memref.load %arg2[%c8] : memref<10xf32, #tpu.memory_space<smem>>
    %c9 = arith.constant 9 : index
    %12 = memref.load %arg2[%c9] : memref<10xf32, #tpu.memory_space<smem>>
    %13 = tpu.iota {dimensions = array<i32: 1>} : vector<1x128xi32>
    %c0_i32_1 = arith.constant 0 : i32
    %14 = vector.broadcast %c0_i32_1 : i32 to vector<1x128xi32>
    %15 = arith.cmpi eq, %13, %14 : vector<1x128xi32>
    %c15_i32 = arith.constant 15 : i32
    %16 = vector.broadcast %c15_i32 : i32 to vector<1x128xi32>
    %17 = arith.cmpi eq, %13, %16 : vector<1x128xi32>
    %c16_i32 = arith.constant 16 : i32
    %18 = vector.broadcast %c16_i32 : i32 to vector<1x128xi32>
    %19 = arith.cmpi slt, %13, %18 : vector<1x128xi32>
    %cst = arith.constant 0.000000e+00 : f32
    %20 = vector.broadcast %cst : f32 to vector<1x128xf32>
    %21 = arith.addf %4, %6 : f32
    %22 = vector.broadcast %4 : f32 to vector<1x128xf32>
    %23 = vector.broadcast %21 : f32 to vector<1x128xf32>
    %24 = arith.select %17, %22, %23 : vector<1x128xi1>, vector<1x128xf32>
    %25 = arith.select %19, %24, %20 : vector<1x128xi1>, vector<1x128xf32>
    %cst_2 = arith.constant dense<true> : vector<1x128xi1>
    %26 = arith.xori %15, %cst_2 : vector<1x128xi1>
    %27 = arith.andi %19, %26 : vector<1x128xi1>
    %28 = vector.broadcast %5 : f32 to vector<1x128xf32>
    %29 = arith.select %27, %28, %20 : vector<1x128xi1>, vector<1x128xf32>
    %cst_3 = arith.constant dense<true> : vector<1x128xi1>
    %30 = arith.xori %17, %cst_3 : vector<1x128xi1>
    %31 = arith.andi %19, %30 : vector<1x128xi1>
    %32 = vector.broadcast %7 : f32 to vector<1x128xf32>
    %33 = arith.select %31, %32, %20 : vector<1x128xi1>, vector<1x128xf32>
    %34 = arith.mulf %5, %3 : f32
    %35 = vector.broadcast %34 : f32 to vector<1x128xf32>
    %36 = arith.select %15, %35, %20 : vector<1x128xi1>, vector<1x128xf32>
    %37 = vector.broadcast %8 : f32 to vector<1x128xf32>
    %38 = arith.select %19, %37, %20 : vector<1x128xi1>, vector<1x128xf32>
    %39 = vector.broadcast %10 : f32 to vector<1x128xf32>
    %40 = arith.select %19, %39, %20 : vector<1x128xi1>, vector<1x128xf32>
    %41 = vector.broadcast %9 : f32 to vector<1x128xf32>
    %42 = vector.broadcast %11 : f32 to vector<1x128xf32>
    %c0_4 = arith.constant 0 : index
    %c0_5 = arith.constant 0 : index
    %43 = vector.load %arg5[%c0_4, %c0_5] : memref<2x128xf32, #tpu.memory_space<vmem>>, vector<1x128xf32>
    %c1_6 = arith.constant 1 : index
    %c0_7 = arith.constant 0 : index
    %44 = vector.load %arg5[%c1_6, %c0_7] : memref<2x128xf32, #tpu.memory_space<vmem>>, vector<1x128xf32>
    %c8_i32 = arith.constant 8 : i32
    %45 = arith.muli %arg0, %c8_i32 : i32
    %c0_i32_8 = arith.constant 0 : i32
    %c0_9 = arith.constant 0 : index
    %46 = arith.index_cast %c0_i32_8 : i32 to index
    %c0_10 = arith.constant 0 : index
    %47 = vector.load %arg4[%c0_9, %46, %c0_10] : memref<2x8x128xf32, #tpu.memory_space<vmem>>, vector<1x1x128xf32>
    %48 = vector.shape_cast %47 : vector<1x1x128xf32> to vector<1x128xf32>
    %49 = vector.shape_cast %43 : vector<1x128xf32> to vector<1x1x128xf32>
    tpu.vector_store %arg4[%c0_9, %46, %c0_10], %49 {strides = array<i32>} : memref<2x8x128xf32, #tpu.memory_space<vmem>>, vector<1x1x128xf32>,
    %c1_11 = arith.constant 1 : index
    %50 = arith.index_cast %c0_i32_8 : i32 to index
    %c0_12 = arith.constant 0 : index
    %51 = vector.load %arg4[%c1_11, %50, %c0_12] : memref<2x8x128xf32, #tpu.memory_space<vmem>>, vector<1x1x128xf32>
    %52 = vector.shape_cast %51 : vector<1x1x128xf32> to vector<1x128xf32>
    %53 = vector.shape_cast %44 : vector<1x128xf32> to vector<1x1x128xf32>
    tpu.vector_store %arg4[%c1_11, %50, %c0_12], %53 {strides = array<i32>} : memref<2x8x128xf32, #tpu.memory_space<vmem>>, vector<1x1x128xf32>,
    %54 = arith.addi %45, %c0_i32_8 : i32
    %55 = arith.index_cast %54 : i32 to index
    %56 = memref.load %arg1[%55] : memref<8xf32, #tpu.memory_space<smem>>
    %c1_i32 = arith.constant 1 : i32
    %57 = tpu.dynamic_rotate %43 by %c1_i32 dim 1 : vector<1x128xf32>, i32 -> vector<1x128xf32>
    %c127_i32 = arith.constant 127 : i32
    %58 = tpu.dynamic_rotate %43 by %c127_i32 dim 1 : vector<1x128xf32>, i32 -> vector<1x128xf32>
    %59 = arith.mulf %25, %43 : vector<1x128xf32>
    %60 = arith.mulf %29, %57 : vector<1x128xf32>
    %61 = arith.addf %59, %60 : vector<1x128xf32>
    %62 = arith.mulf %33, %58 : vector<1x128xf32>
    %63 = arith.addf %61, %62 : vector<1x128xf32>
    %64 = arith.addf %63, %36 : vector<1x128xf32>
    %65 = math.log %43 : vector<1x128xf32>
    %66 = vector.broadcast %12 : f32 to vector<1x128xf32>
    %67 = arith.mulf %66, %65 : vector<1x128xf32>
    %68 = math.exp %67 : vector<1x128xf32>
    %69 = arith.mulf %38, %68 : vector<1x128xf32>
    %70 = arith.mulf %40, %44 : vector<1x128xf32>
    %71 = arith.mulf %69, %43 : vector<1x128xf32>
    %72 = arith.addf %71, %70 : vector<1x128xf32>
    %73 = arith.mulf %41, %68 : vector<1x128xf32>
    %cst_13 = arith.constant 1.000000e+00 : f32
    %74 = vector.broadcast %cst_13 : f32 to vector<1x128xf32>
    %75 = arith.addf %73, %74 : vector<1x128xf32>
    %76 = tpu.reciprocal %75 {approx = true} : vector<1x128xf32> -> vector<1x128xf32>
    %77 = arith.mulf %75, %76 : vector<1x128xf32>
    %cst_14 = arith.constant 2.000000e+00 : f32
    %78 = vector.broadcast %cst_14 : f32 to vector<1x128xf32>
    %79 = arith.subf %78, %77 : vector<1x128xf32>
    %80 = arith.mulf %76, %79 : vector<1x128xf32>
    %81 = arith.addf %64, %72 : vector<1x128xf32>
    %82 = arith.mulf %81, %80 : vector<1x128xf32>
    %cst_15 = arith.constant 0.000000e+00 : f32
    %83 = vector.broadcast %cst_15 : f32 to vector<1x128xf32>
    %84 = arith.subf %83, %72 : vector<1x128xf32>
    %85 = arith.mulf %84, %42 : vector<1x128xf32>
    %86 = vector.broadcast %56 : f32 to vector<1x128xf32>
    %87 = arith.mulf %86, %82 : vector<1x128xf32>
    %88 = arith.addf %43, %87 : vector<1x128xf32>
    %89 = vector.broadcast %56 : f32 to vector<1x128xf32>
    %90 = arith.mulf %89, %85 : vector<1x128xf32>
    %91 = arith.addf %44, %90 : vector<1x128xf32>
    %c1_i32_16 = arith.constant 1 : i32
    %c0_17 = arith.constant 0 : index
    %92 = arith.index_cast %c1_i32_16 : i32 to index
    %c0_18 = arith.constant 0 : index
    %93 = vector.load %arg4[%c0_17, %92, %c0_18] : memref<2x8x128xf32, #tpu.memory_space<vmem>>, vector<1x1x128xf32>
    %94 = vector.shape_cast %93 : vector<1x1x128xf32> to vector<1x128xf32>
    %95 = vector.shape_cast %88 : vector<1x128xf32> to vector<1x1x128xf32>
    tpu.vector_store %arg4[%c0_17, %92, %c0_18], %95 {strides = array<i32>} : memref<2x8x128xf32, #tpu.memory_space<vmem>>, vector<1x1x128xf32>,
    %c1_19 = arith.constant 1 : index
    %96 = arith.index_cast %c1_i32_16 : i32 to index
    %c0_20 = arith.constant 0 : index
    %97 = vector.load %arg4[%c1_19, %96, %c0_20] : memref<2x8x128xf32, #tpu.memory_space<vmem>>, vector<1x1x128xf32>
    %98 = vector.shape_cast %97 : vector<1x1x128xf32> to vector<1x128xf32>
    %99 = vector.shape_cast %91 : vector<1x128xf32> to vector<1x1x128xf32>
    tpu.vector_store %arg4[%c1_19, %96, %c0_20], %99 {strides = array<i32>} : memref<2x8x128xf32, #tpu.memory_space<vmem>>, vector<1x1x128xf32>,
    %100 = arith.addi %45, %c1_i32_16 : i32
    %101 = arith.index_cast %100 : i32 to index
    %102 = memref.load %arg1[%101] : memref<8xf32, #tpu.memory_space<smem>>
    %c1_i32_21 = arith.constant 1 : i32
    %103 = tpu.dynamic_rotate %88 by %c1_i32_21 dim 1 : vector<1x128xf32>, i32 -> vector<1x128xf32>
    %c127_i32_22 = arith.constant 127 : i32
    %104 = tpu.dynamic_rotate %88 by %c127_i32_22 dim 1 : vector<1x128xf32>, i32 -> vector<1x128xf32>
    %105 = arith.mulf %25, %88 : vector<1x128xf32>
    %106 = arith.mulf %29, %103 : vector<1x128xf32>
    %107 = arith.addf %105, %106 : vector<1x128xf32>
    %108 = arith.mulf %33, %104 : vector<1x128xf32>
    %109 = arith.addf %107, %108 : vector<1x128xf32>
    %110 = arith.addf %109, %36 : vector<1x128xf32>
    %111 = math.log %88 : vector<1x128xf32>
    %112 = vector.broadcast %12 : f32 to vector<1x128xf32>
    %113 = arith.mulf %112, %111 : vector<1x128xf32>
    %114 = math.exp %113 : vector<1x128xf32>
    %115 = arith.mulf %38, %114 : vector<1x128xf32>
    %116 = arith.mulf %40, %91 : vector<1x128xf32>
    %117 = arith.mulf %115, %88 : vector<1x128xf32>
    %118 = arith.addf %117, %116 : vector<1x128xf32>
    %119 = arith.mulf %41, %114 : vector<1x128xf32>
    %cst_23 = arith.constant 1.000000e+00 : f32
    %120 = vector.broadcast %cst_23 : f32 to vector<1x128xf32>
    %121 = arith.addf %119, %120 : vector<1x128xf32>
    %122 = tpu.reciprocal %121 {approx = true} : vector<1x128xf32> -> vector<1x128xf32>
    %123 = arith.mulf %121, %122 : vector<1x128xf32>
    %cst_24 = arith.constant 2.000000e+00 : f32
    %124 = vector.broadcast %cst_24 : f32 to vector<1x128xf32>
    %125 = arith.subf %124, %123 : vector<1x128xf32>
    %126 = arith.mulf %122, %125 : vector<1x128xf32>
    %127 = arith.addf %110, %118 : vector<1x128xf32>
    %128 = arith.mulf %127, %126 : vector<1x128xf32>
    %cst_25 = arith.constant 0.000000e+00 : f32
    %129 = vector.broadcast %cst_25 : f32 to vector<1x128xf32>
    %130 = arith.subf %129, %118 : vector<1x128xf32>
    %131 = arith.mulf %130, %42 : vector<1x128xf32>
    %132 = vector.broadcast %102 : f32 to vector<1x128xf32>
    %133 = arith.mulf %132, %128 : vector<1x128xf32>
    %134 = arith.addf %88, %133 : vector<1x128xf32>
    %135 = vector.broadcast %102 : f32 to vector<1x128xf32>
    %136 = arith.mulf %135, %131 : vector<1x128xf32>
    %137 = arith.addf %91, %136 : vector<1x128xf32>
    %c2_i32 = arith.constant 2 : i32
    %c0_26 = arith.constant 0 : index
    %138 = arith.index_cast %c2_i32 : i32 to index
    %c0_27 = arith.constant 0 : index
    %139 = vector.load %arg4[%c0_26, %138, %c0_27] : memref<2x8x128xf32, #tpu.memory_space<vmem>>, vector<1x1x128xf32>
    %140 = vector.shape_cast %139 : vector<1x1x128xf32> to vector<1x128xf32>
    %141 = vector.shape_cast %134 : vector<1x128xf32> to vector<1x1x128xf32>
    tpu.vector_store %arg4[%c0_26, %138, %c0_27], %141 {strides = array<i32>} : memref<2x8x128xf32, #tpu.memory_space<vmem>>, vector<1x1x128xf32>,
    %c1_28 = arith.constant 1 : index
    %142 = arith.index_cast %c2_i32 : i32 to index
    %c0_29 = arith.constant 0 : index
    %143 = vector.load %arg4[%c1_28, %142, %c0_29] : memref<2x8x128xf32, #tpu.memory_space<vmem>>, vector<1x1x128xf32>
    %144 = vector.shape_cast %143 : vector<1x1x128xf32> to vector<1x128xf32>
    %145 = vector.shape_cast %137 : vector<1x128xf32> to vector<1x1x128xf32>
    tpu.vector_store %arg4[%c1_28, %142, %c0_29], %145 {strides = array<i32>} : memref<2x8x128xf32, #tpu.memory_space<vmem>>, vector<1x1x128xf32>,
    %146 = arith.addi %45, %c2_i32 : i32
    %147 = arith.index_cast %146 : i32 to index
    %148 = memref.load %arg1[%147] : memref<8xf32, #tpu.memory_space<smem>>
    %c1_i32_30 = arith.constant 1 : i32
    %149 = tpu.dynamic_rotate %134 by %c1_i32_30 dim 1 : vector<1x128xf32>, i32 -> vector<1x128xf32>
    %c127_i32_31 = arith.constant 127 : i32
    %150 = tpu.dynamic_rotate %134 by %c127_i32_31 dim 1 : vector<1x128xf32>, i32 -> vector<1x128xf32>
    %151 = arith.mulf %25, %134 : vector<1x128xf32>
    %152 = arith.mulf %29, %149 : vector<1x128xf32>
    %153 = arith.addf %151, %152 : vector<1x128xf32>
    %154 = arith.mulf %33, %150 : vector<1x128xf32>
    %155 = arith.addf %153, %154 : vector<1x128xf32>
    %156 = arith.addf %155, %36 : vector<1x128xf32>
    %157 = math.log %134 : vector<1x128xf32>
    %158 = vector.broadcast %12 : f32 to vector<1x128xf32>
    %159 = arith.mulf %158, %157 : vector<1x128xf32>
    %160 = math.exp %159 : vector<1x128xf32>
    %161 = arith.mulf %38, %160 : vector<1x128xf32>
    %162 = arith.mulf %40, %137 : vector<1x128xf32>
    %163 = arith.mulf %161, %134 : vector<1x128xf32>
    %164 = arith.addf %163, %162 : vector<1x128xf32>
    %165 = arith.mulf %41, %160 : vector<1x128xf32>
    %cst_32 = arith.constant 1.000000e+00 : f32
    %166 = vector.broadcast %cst_32 : f32 to vector<1x128xf32>
    %167 = arith.addf %165, %166 : vector<1x128xf32>
    %168 = tpu.reciprocal %167 {approx = true} : vector<1x128xf32> -> vector<1x128xf32>
    %169 = arith.mulf %167, %168 : vector<1x128xf32>
    %cst_33 = arith.constant 2.000000e+00 : f32
    %170 = vector.broadcast %cst_33 : f32 to vector<1x128xf32>
    %171 = arith.subf %170, %169 : vector<1x128xf32>
    %172 = arith.mulf %168, %171 : vector<1x128xf32>
    %173 = arith.addf %156, %164 : vector<1x128xf32>
    %174 = arith.mulf %173, %172 : vector<1x128xf32>
    %cst_34 = arith.constant 0.000000e+00 : f32
    %175 = vector.broadcast %cst_34 : f32 to vector<1x128xf32>
    %176 = arith.subf %175, %164 : vector<1x128xf32>
    %177 = arith.mulf %176, %42 : vector<1x128xf32>
    %178 = vector.broadcast %148 : f32 to vector<1x128xf32>
    %179 = arith.mulf %178, %174 : vector<1x128xf32>
    %180 = arith.addf %134, %179 : vector<1x128xf32>
    %181 = vector.broadcast %148 : f32 to vector<1x128xf32>
    %182 = arith.mulf %181, %177 : vector<1x128xf32>
    %183 = arith.addf %137, %182 : vector<1x128xf32>
    %c3_i32 = arith.constant 3 : i32
    %c0_35 = arith.constant 0 : index
    %184 = arith.index_cast %c3_i32 : i32 to index
    %c0_36 = arith.constant 0 : index
    %185 = vector.load %arg4[%c0_35, %184, %c0_36] : memref<2x8x128xf32, #tpu.memory_space<vmem>>, vector<1x1x128xf32>
    %186 = vector.shape_cast %185 : vector<1x1x128xf32> to vector<1x128xf32>
    %187 = vector.shape_cast %180 : vector<1x128xf32> to vector<1x1x128xf32>
    tpu.vector_store %arg4[%c0_35, %184, %c0_36], %187 {strides = array<i32>} : memref<2x8x128xf32, #tpu.memory_space<vmem>>, vector<1x1x128xf32>,
    %c1_37 = arith.constant 1 : index
    %188 = arith.index_cast %c3_i32 : i32 to index
    %c0_38 = arith.constant 0 : index
    %189 = vector.load %arg4[%c1_37, %188, %c0_38] : memref<2x8x128xf32, #tpu.memory_space<vmem>>, vector<1x1x128xf32>
    %190 = vector.shape_cast %189 : vector<1x1x128xf32> to vector<1x128xf32>
    %191 = vector.shape_cast %183 : vector<1x128xf32> to vector<1x1x128xf32>
    tpu.vector_store %arg4[%c1_37, %188, %c0_38], %191 {strides = array<i32>} : memref<2x8x128xf32, #tpu.memory_space<vmem>>, vector<1x1x128xf32>,
    %192 = arith.addi %45, %c3_i32 : i32
    %193 = arith.index_cast %192 : i32 to index
    %194 = memref.load %arg1[%193] : memref<8xf32, #tpu.memory_space<smem>>
    %c1_i32_39 = arith.constant 1 : i32
    %195 = tpu.dynamic_rotate %180 by %c1_i32_39 dim 1 : vector<1x128xf32>, i32 -> vector<1x128xf32>
    %c127_i32_40 = arith.constant 127 : i32
    %196 = tpu.dynamic_rotate %180 by %c127_i32_40 dim 1 : vector<1x128xf32>, i32 -> vector<1x128xf32>
    %197 = arith.mulf %25, %180 : vector<1x128xf32>
    %198 = arith.mulf %29, %195 : vector<1x128xf32>
    %199 = arith.addf %197, %198 : vector<1x128xf32>
    %200 = arith.mulf %33, %196 : vector<1x128xf32>
    %201 = arith.addf %199, %200 : vector<1x128xf32>
    %202 = arith.addf %201, %36 : vector<1x128xf32>
    %203 = math.log %180 : vector<1x128xf32>
    %204 = vector.broadcast %12 : f32 to vector<1x128xf32>
    %205 = arith.mulf %204, %203 : vector<1x128xf32>
    %206 = math.exp %205 : vector<1x128xf32>
    %207 = arith.mulf %38, %206 : vector<1x128xf32>
    %208 = arith.mulf %40, %183 : vector<1x128xf32>
    %209 = arith.mulf %207, %180 : vector<1x128xf32>
    %210 = arith.addf %209, %208 : vector<1x128xf32>
    %211 = arith.mulf %41, %206 : vector<1x128xf32>
    %cst_41 = arith.constant 1.000000e+00 : f32
    %212 = vector.broadcast %cst_41 : f32 to vector<1x128xf32>
    %213 = arith.addf %211, %212 : vector<1x128xf32>
    %214 = tpu.reciprocal %213 {approx = true} : vector<1x128xf32> -> vector<1x128xf32>
    %215 = arith.mulf %213, %214 : vector<1x128xf32>
    %cst_42 = arith.constant 2.000000e+00 : f32
    %216 = vector.broadcast %cst_42 : f32 to vector<1x128xf32>
    %217 = arith.subf %216, %215 : vector<1x128xf32>
    %218 = arith.mulf %214, %217 : vector<1x128xf32>
    %219 = arith.addf %202, %210 : vector<1x128xf32>
    %220 = arith.mulf %219, %218 : vector<1x128xf32>
    %cst_43 = arith.constant 0.000000e+00 : f32
    %221 = vector.broadcast %cst_43 : f32 to vector<1x128xf32>
    %222 = arith.subf %221, %210 : vector<1x128xf32>
    %223 = arith.mulf %222, %42 : vector<1x128xf32>
    %224 = vector.broadcast %194 : f32 to vector<1x128xf32>
    %225 = arith.mulf %224, %220 : vector<1x128xf32>
    %226 = arith.addf %180, %225 : vector<1x128xf32>
    %227 = vector.broadcast %194 : f32 to vector<1x128xf32>
    %228 = arith.mulf %227, %223 : vector<1x128xf32>
    %229 = arith.addf %183, %228 : vector<1x128xf32>
    %c4_i32 = arith.constant 4 : i32
    %c0_44 = arith.constant 0 : index
    %230 = arith.index_cast %c4_i32 : i32 to index
    %c0_45 = arith.constant 0 : index
    %231 = vector.load %arg4[%c0_44, %230, %c0_45] : memref<2x8x128xf32, #tpu.memory_space<vmem>>, vector<1x1x128xf32>
    %232 = vector.shape_cast %231 : vector<1x1x128xf32> to vector<1x128xf32>
    %233 = vector.shape_cast %226 : vector<1x128xf32> to vector<1x1x128xf32>
    tpu.vector_store %arg4[%c0_44, %230, %c0_45], %233 {strides = array<i32>} : memref<2x8x128xf32, #tpu.memory_space<vmem>>, vector<1x1x128xf32>,
    %c1_46 = arith.constant 1 : index
    %234 = arith.index_cast %c4_i32 : i32 to index
    %c0_47 = arith.constant 0 : index
    %235 = vector.load %arg4[%c1_46, %234, %c0_47] : memref<2x8x128xf32, #tpu.memory_space<vmem>>, vector<1x1x128xf32>
    %236 = vector.shape_cast %235 : vector<1x1x128xf32> to vector<1x128xf32>
    %237 = vector.shape_cast %229 : vector<1x128xf32> to vector<1x1x128xf32>
    tpu.vector_store %arg4[%c1_46, %234, %c0_47], %237 {strides = array<i32>} : memref<2x8x128xf32, #tpu.memory_space<vmem>>, vector<1x1x128xf32>,
    %238 = arith.addi %45, %c4_i32 : i32
    %239 = arith.index_cast %238 : i32 to index
    %240 = memref.load %arg1[%239] : memref<8xf32, #tpu.memory_space<smem>>
    %c1_i32_48 = arith.constant 1 : i32
    %241 = tpu.dynamic_rotate %226 by %c1_i32_48 dim 1 : vector<1x128xf32>, i32 -> vector<1x128xf32>
    %c127_i32_49 = arith.constant 127 : i32
    %242 = tpu.dynamic_rotate %226 by %c127_i32_49 dim 1 : vector<1x128xf32>, i32 -> vector<1x128xf32>
    %243 = arith.mulf %25, %226 : vector<1x128xf32>
    %244 = arith.mulf %29, %241 : vector<1x128xf32>
    %245 = arith.addf %243, %244 : vector<1x128xf32>
    %246 = arith.mulf %33, %242 : vector<1x128xf32>
    %247 = arith.addf %245, %246 : vector<1x128xf32>
    %248 = arith.addf %247, %36 : vector<1x128xf32>
    %249 = math.log %226 : vector<1x128xf32>
    %250 = vector.broadcast %12 : f32 to vector<1x128xf32>
    %251 = arith.mulf %250, %249 : vector<1x128xf32>
    %252 = math.exp %251 : vector<1x128xf32>
    %253 = arith.mulf %38, %252 : vector<1x128xf32>
    %254 = arith.mulf %40, %229 : vector<1x128xf32>
    %255 = arith.mulf %253, %226 : vector<1x128xf32>
    %256 = arith.addf %255, %254 : vector<1x128xf32>
    %257 = arith.mulf %41, %252 : vector<1x128xf32>
    %cst_50 = arith.constant 1.000000e+00 : f32
    %258 = vector.broadcast %cst_50 : f32 to vector<1x128xf32>
    %259 = arith.addf %257, %258 : vector<1x128xf32>
    %260 = tpu.reciprocal %259 {approx = true} : vector<1x128xf32> -> vector<1x128xf32>
    %261 = arith.mulf %259, %260 : vector<1x128xf32>
    %cst_51 = arith.constant 2.000000e+00 : f32
    %262 = vector.broadcast %cst_51 : f32 to vector<1x128xf32>
    %263 = arith.subf %262, %261 : vector<1x128xf32>
    %264 = arith.mulf %260, %263 : vector<1x128xf32>
    %265 = arith.addf %248, %256 : vector<1x128xf32>
    %266 = arith.mulf %265, %264 : vector<1x128xf32>
    %cst_52 = arith.constant 0.000000e+00 : f32
    %267 = vector.broadcast %cst_52 : f32 to vector<1x128xf32>
    %268 = arith.subf %267, %256 : vector<1x128xf32>
    %269 = arith.mulf %268, %42 : vector<1x128xf32>
    %270 = vector.broadcast %240 : f32 to vector<1x128xf32>
    %271 = arith.mulf %270, %266 : vector<1x128xf32>
    %272 = arith.addf %226, %271 : vector<1x128xf32>
    %273 = vector.broadcast %240 : f32 to vector<1x128xf32>
    %274 = arith.mulf %273, %269 : vector<1x128xf32>
    %275 = arith.addf %229, %274 : vector<1x128xf32>
    %c5_i32 = arith.constant 5 : i32
    %c0_53 = arith.constant 0 : index
    %276 = arith.index_cast %c5_i32 : i32 to index
    %c0_54 = arith.constant 0 : index
    %277 = vector.load %arg4[%c0_53, %276, %c0_54] : memref<2x8x128xf32, #tpu.memory_space<vmem>>, vector<1x1x128xf32>
    %278 = vector.shape_cast %277 : vector<1x1x128xf32> to vector<1x128xf32>
    %279 = vector.shape_cast %272 : vector<1x128xf32> to vector<1x1x128xf32>
    tpu.vector_store %arg4[%c0_53, %276, %c0_54], %279 {strides = array<i32>} : memref<2x8x128xf32, #tpu.memory_space<vmem>>, vector<1x1x128xf32>,
    %c1_55 = arith.constant 1 : index
    %280 = arith.index_cast %c5_i32 : i32 to index
    %c0_56 = arith.constant 0 : index
    %281 = vector.load %arg4[%c1_55, %280, %c0_56] : memref<2x8x128xf32, #tpu.memory_space<vmem>>, vector<1x1x128xf32>
    %282 = vector.shape_cast %281 : vector<1x1x128xf32> to vector<1x128xf32>
    %283 = vector.shape_cast %275 : vector<1x128xf32> to vector<1x1x128xf32>
    tpu.vector_store %arg4[%c1_55, %280, %c0_56], %283 {strides = array<i32>} : memref<2x8x128xf32, #tpu.memory_space<vmem>>, vector<1x1x128xf32>,
    %284 = arith.addi %45, %c5_i32 : i32
    %285 = arith.index_cast %284 : i32 to index
    %286 = memref.load %arg1[%285] : memref<8xf32, #tpu.memory_space<smem>>
    %c1_i32_57 = arith.constant 1 : i32
    %287 = tpu.dynamic_rotate %272 by %c1_i32_57 dim 1 : vector<1x128xf32>, i32 -> vector<1x128xf32>
    %c127_i32_58 = arith.constant 127 : i32
    %288 = tpu.dynamic_rotate %272 by %c127_i32_58 dim 1 : vector<1x128xf32>, i32 -> vector<1x128xf32>
    %289 = arith.mulf %25, %272 : vector<1x128xf32>
    %290 = arith.mulf %29, %287 : vector<1x128xf32>
    %291 = arith.addf %289, %290 : vector<1x128xf32>
    %292 = arith.mulf %33, %288 : vector<1x128xf32>
    %293 = arith.addf %291, %292 : vector<1x128xf32>
    %294 = arith.addf %293, %36 : vector<1x128xf32>
    %295 = math.log %272 : vector<1x128xf32>
    %296 = vector.broadcast %12 : f32 to vector<1x128xf32>
    %297 = arith.mulf %296, %295 : vector<1x128xf32>
    %298 = math.exp %297 : vector<1x128xf32>
    %299 = arith.mulf %38, %298 : vector<1x128xf32>
    %300 = arith.mulf %40, %275 : vector<1x128xf32>
    %301 = arith.mulf %299, %272 : vector<1x128xf32>
    %302 = arith.addf %301, %300 : vector<1x128xf32>
    %303 = arith.mulf %41, %298 : vector<1x128xf32>
    %cst_59 = arith.constant 1.000000e+00 : f32
    %304 = vector.broadcast %cst_59 : f32 to vector<1x128xf32>
    %305 = arith.addf %303, %304 : vector<1x128xf32>
    %306 = tpu.reciprocal %305 {approx = true} : vector<1x128xf32> -> vector<1x128xf32>
    %307 = arith.mulf %305, %306 : vector<1x128xf32>
    %cst_60 = arith.constant 2.000000e+00 : f32
    %308 = vector.broadcast %cst_60 : f32 to vector<1x128xf32>
    %309 = arith.subf %308, %307 : vector<1x128xf32>
    %310 = arith.mulf %306, %309 : vector<1x128xf32>
    %311 = arith.addf %294, %302 : vector<1x128xf32>
    %312 = arith.mulf %311, %310 : vector<1x128xf32>
    %cst_61 = arith.constant 0.000000e+00 : f32
    %313 = vector.broadcast %cst_61 : f32 to vector<1x128xf32>
    %314 = arith.subf %313, %302 : vector<1x128xf32>
    %315 = arith.mulf %314, %42 : vector<1x128xf32>
    %316 = vector.broadcast %286 : f32 to vector<1x128xf32>
    %317 = arith.mulf %316, %312 : vector<1x128xf32>
    %318 = arith.addf %272, %317 : vector<1x128xf32>
    %319 = vector.broadcast %286 : f32 to vector<1x128xf32>
    %320 = arith.mulf %319, %315 : vector<1x128xf32>
    %321 = arith.addf %275, %320 : vector<1x128xf32>
    %c6_i32 = arith.constant 6 : i32
    %c0_62 = arith.constant 0 : index
    %322 = arith.index_cast %c6_i32 : i32 to index
    %c0_63 = arith.constant 0 : index
    %323 = vector.load %arg4[%c0_62, %322, %c0_63] : memref<2x8x128xf32, #tpu.memory_space<vmem>>, vector<1x1x128xf32>
    %324 = vector.shape_cast %323 : vector<1x1x128xf32> to vector<1x128xf32>
    %325 = vector.shape_cast %318 : vector<1x128xf32> to vector<1x1x128xf32>
    tpu.vector_store %arg4[%c0_62, %322, %c0_63], %325 {strides = array<i32>} : memref<2x8x128xf32, #tpu.memory_space<vmem>>, vector<1x1x128xf32>,
    %c1_64 = arith.constant 1 : index
    %326 = arith.index_cast %c6_i32 : i32 to index
    %c0_65 = arith.constant 0 : index
    %327 = vector.load %arg4[%c1_64, %326, %c0_65] : memref<2x8x128xf32, #tpu.memory_space<vmem>>, vector<1x1x128xf32>
    %328 = vector.shape_cast %327 : vector<1x1x128xf32> to vector<1x128xf32>
    %329 = vector.shape_cast %321 : vector<1x128xf32> to vector<1x1x128xf32>
    tpu.vector_store %arg4[%c1_64, %326, %c0_65], %329 {strides = array<i32>} : memref<2x8x128xf32, #tpu.memory_space<vmem>>, vector<1x1x128xf32>,
    %330 = arith.addi %45, %c6_i32 : i32
    %331 = arith.index_cast %330 : i32 to index
    %332 = memref.load %arg1[%331] : memref<8xf32, #tpu.memory_space<smem>>
    %c1_i32_66 = arith.constant 1 : i32
    %333 = tpu.dynamic_rotate %318 by %c1_i32_66 dim 1 : vector<1x128xf32>, i32 -> vector<1x128xf32>
    %c127_i32_67 = arith.constant 127 : i32
    %334 = tpu.dynamic_rotate %318 by %c127_i32_67 dim 1 : vector<1x128xf32>, i32 -> vector<1x128xf32>
    %335 = arith.mulf %25, %318 : vector<1x128xf32>
    %336 = arith.mulf %29, %333 : vector<1x128xf32>
    %337 = arith.addf %335, %336 : vector<1x128xf32>
    %338 = arith.mulf %33, %334 : vector<1x128xf32>
    %339 = arith.addf %337, %338 : vector<1x128xf32>
    %340 = arith.addf %339, %36 : vector<1x128xf32>
    %341 = math.log %318 : vector<1x128xf32>
    %342 = vector.broadcast %12 : f32 to vector<1x128xf32>
    %343 = arith.mulf %342, %341 : vector<1x128xf32>
    %344 = math.exp %343 : vector<1x128xf32>
    %345 = arith.mulf %38, %344 : vector<1x128xf32>
    %346 = arith.mulf %40, %321 : vector<1x128xf32>
    %347 = arith.mulf %345, %318 : vector<1x128xf32>
    %348 = arith.addf %347, %346 : vector<1x128xf32>
    %349 = arith.mulf %41, %344 : vector<1x128xf32>
    %cst_68 = arith.constant 1.000000e+00 : f32
    %350 = vector.broadcast %cst_68 : f32 to vector<1x128xf32>
    %351 = arith.addf %349, %350 : vector<1x128xf32>
    %352 = tpu.reciprocal %351 {approx = true} : vector<1x128xf32> -> vector<1x128xf32>
    %353 = arith.mulf %351, %352 : vector<1x128xf32>
    %cst_69 = arith.constant 2.000000e+00 : f32
    %354 = vector.broadcast %cst_69 : f32 to vector<1x128xf32>
    %355 = arith.subf %354, %353 : vector<1x128xf32>
    %356 = arith.mulf %352, %355 : vector<1x128xf32>
    %357 = arith.addf %340, %348 : vector<1x128xf32>
    %358 = arith.mulf %357, %356 : vector<1x128xf32>
    %cst_70 = arith.constant 0.000000e+00 : f32
    %359 = vector.broadcast %cst_70 : f32 to vector<1x128xf32>
    %360 = arith.subf %359, %348 : vector<1x128xf32>
    %361 = arith.mulf %360, %42 : vector<1x128xf32>
    %362 = vector.broadcast %332 : f32 to vector<1x128xf32>
    %363 = arith.mulf %362, %358 : vector<1x128xf32>
    %364 = arith.addf %318, %363 : vector<1x128xf32>
    %365 = vector.broadcast %332 : f32 to vector<1x128xf32>
    %366 = arith.mulf %365, %361 : vector<1x128xf32>
    %367 = arith.addf %321, %366 : vector<1x128xf32>
    %c7_i32 = arith.constant 7 : i32
    %c0_71 = arith.constant 0 : index
    %368 = arith.index_cast %c7_i32 : i32 to index
    %c0_72 = arith.constant 0 : index
    %369 = vector.load %arg4[%c0_71, %368, %c0_72] : memref<2x8x128xf32, #tpu.memory_space<vmem>>, vector<1x1x128xf32>
    %370 = vector.shape_cast %369 : vector<1x1x128xf32> to vector<1x128xf32>
    %371 = vector.shape_cast %364 : vector<1x128xf32> to vector<1x1x128xf32>
    tpu.vector_store %arg4[%c0_71, %368, %c0_72], %371 {strides = array<i32>} : memref<2x8x128xf32, #tpu.memory_space<vmem>>, vector<1x1x128xf32>,
    %c1_73 = arith.constant 1 : index
    %372 = arith.index_cast %c7_i32 : i32 to index
    %c0_74 = arith.constant 0 : index
    %373 = vector.load %arg4[%c1_73, %372, %c0_74] : memref<2x8x128xf32, #tpu.memory_space<vmem>>, vector<1x1x128xf32>
    %374 = vector.shape_cast %373 : vector<1x1x128xf32> to vector<1x128xf32>
    %375 = vector.shape_cast %367 : vector<1x128xf32> to vector<1x1x128xf32>
    tpu.vector_store %arg4[%c1_73, %372, %c0_74], %375 {strides = array<i32>} : memref<2x8x128xf32, #tpu.memory_space<vmem>>, vector<1x1x128xf32>,
    %376 = arith.addi %45, %c7_i32 : i32
    %377 = arith.index_cast %376 : i32 to index
    %378 = memref.load %arg1[%377] : memref<8xf32, #tpu.memory_space<smem>>
    %c1_i32_75 = arith.constant 1 : i32
    %379 = tpu.dynamic_rotate %364 by %c1_i32_75 dim 1 : vector<1x128xf32>, i32 -> vector<1x128xf32>
    %c127_i32_76 = arith.constant 127 : i32
    %380 = tpu.dynamic_rotate %364 by %c127_i32_76 dim 1 : vector<1x128xf32>, i32 -> vector<1x128xf32>
    %381 = arith.mulf %25, %364 : vector<1x128xf32>
    %382 = arith.mulf %29, %379 : vector<1x128xf32>
    %383 = arith.addf %381, %382 : vector<1x128xf32>
    %384 = arith.mulf %33, %380 : vector<1x128xf32>
    %385 = arith.addf %383, %384 : vector<1x128xf32>
    %386 = arith.addf %385, %36 : vector<1x128xf32>
    %387 = math.log %364 : vector<1x128xf32>
    %388 = vector.broadcast %12 : f32 to vector<1x128xf32>
    %389 = arith.mulf %388, %387 : vector<1x128xf32>
    %390 = math.exp %389 : vector<1x128xf32>
    %391 = arith.mulf %38, %390 : vector<1x128xf32>
    %392 = arith.mulf %40, %367 : vector<1x128xf32>
    %393 = arith.mulf %391, %364 : vector<1x128xf32>
    %394 = arith.addf %393, %392 : vector<1x128xf32>
    %395 = arith.mulf %41, %390 : vector<1x128xf32>
    %cst_77 = arith.constant 1.000000e+00 : f32
    %396 = vector.broadcast %cst_77 : f32 to vector<1x128xf32>
    %397 = arith.addf %395, %396 : vector<1x128xf32>
    %398 = tpu.reciprocal %397 {approx = true} : vector<1x128xf32> -> vector<1x128xf32>
    %399 = arith.mulf %397, %398 : vector<1x128xf32>
    %cst_78 = arith.constant 2.000000e+00 : f32
    %400 = vector.broadcast %cst_78 : f32 to vector<1x128xf32>
    %401 = arith.subf %400, %399 : vector<1x128xf32>
    %402 = arith.mulf %398, %401 : vector<1x128xf32>
    %403 = arith.addf %386, %394 : vector<1x128xf32>
    %404 = arith.mulf %403, %402 : vector<1x128xf32>
    %cst_79 = arith.constant 0.000000e+00 : f32
    %405 = vector.broadcast %cst_79 : f32 to vector<1x128xf32>
    %406 = arith.subf %405, %394 : vector<1x128xf32>
    %407 = arith.mulf %406, %42 : vector<1x128xf32>
    %408 = vector.broadcast %378 : f32 to vector<1x128xf32>
    %409 = arith.mulf %408, %404 : vector<1x128xf32>
    %410 = arith.addf %364, %409 : vector<1x128xf32>
    %411 = vector.broadcast %378 : f32 to vector<1x128xf32>
    %412 = arith.mulf %411, %407 : vector<1x128xf32>
    %413 = arith.addf %367, %412 : vector<1x128xf32>
    %c8_i32_80 = arith.constant 8 : i32
    %c0_81 = arith.constant 0 : index
    %c0_82 = arith.constant 0 : index
    %414 = vector.load %arg5[%c0_81, %c0_82] : memref<2x128xf32, #tpu.memory_space<vmem>>, vector<1x128xf32>
    tpu.vector_store %arg5[%c0_81, %c0_82], %410 {strides = array<i32>} : memref<2x128xf32, #tpu.memory_space<vmem>>, vector<1x128xf32>,
    %c1_83 = arith.constant 1 : index
    %c0_84 = arith.constant 0 : index
    %415 = vector.load %arg5[%c1_83, %c0_84] : memref<2x128xf32, #tpu.memory_space<vmem>>, vector<1x128xf32>
    tpu.vector_store %arg5[%c1_83, %c0_84], %413 {strides = array<i32>} : memref<2x128xf32, #tpu.memory_space<vmem>>, vector<1x128xf32>,
    return
  }
  func.func @transform_0(%arg0: i32) -> i32 {
    %c0_i32 = arith.constant 0 : i32
    %c0_i32_0 = arith.constant 0 : i32
    return %c0_i32 : i32
  }
  func.func @transform_1(%arg0: i32) -> i32 {
    %c0_i32 = arith.constant 0 : i32
    %c0_i32_0 = arith.constant 0 : i32
    return %c0_i32 : i32
  }
  func.func @transform_2(%arg0: i32) -> (i32, i32) {
    %c0_i32 = arith.constant 0 : i32
    %c0_i32_0 = arith.constant 0 : i32
    %c0_i32_1 = arith.constant 0 : i32
    return %c0_i32, %c0_i32_0 : i32, i32
  }
  func.func @transform_3(%arg0: i32) -> (i32, i32, i32) {
    %c0_i32 = arith.constant 0 : i32
    %c0_i32_0 = arith.constant 0 : i32
    %c0_i32_1 = arith.constant 0 : i32
    return %c0_i32, %arg0, %c0_i32_0 : i32, i32, i32
  }
}

</mosaic_0001>

<llo_original>
// kernel: tpu_custom_call.1
$region0: #{tpu_custom_call.1}
  #allocation0 [shape = 'u32[]', space=smem, size = 0x4, offset = 0x4, fixed_abs, tag = 'smem constant byte address 0x4 - core index']
  #allocation1 [shape = 'u32[144,128]{1,0:T(1,128)}', space=vmem, size = 0x12000, scoped, tag = 'internal scratch']
  #allocation2 [shape = 'f32[2,128]{1,0:T(2,128)}', space=vmem, size = 0x400, scoped, tag = 'scratch operand']
  %s0 = inlined_call_operand.hbm [shape: f32[8], index: 0, kind: input, shape index: {}]
  %s1 = inlined_call_operand.vmem [shape: f32[10], index: 1, kind: input, shape index: {}]
  %s2 = inlined_call_operand.vmem [shape: f32[2,128], index: 2, kind: input, shape index: {}]
  %s3 = inlined_call_operand.hbm [shape: f32[2,8,128], index: 3, kind: output, shape index: {}]
  %s4 = sld [smem:[#allocation0]]
  $region34: #{tpu_custom_call.1} parent=0
    _
  %s6 = ssub.s32 1, %s4
  %s7 = scalar_select 0, %s6, %s4
  $region1: #{tpu_custom_call.1} parent=0
    #allocation3 [shape = 'u8[512]{0}', space=smem, size = 0x200, scoped, tag = 'input window, operand 0, single buffered']
    #allocation4 [shape = 's32[1]{0}', space=sflag, size = 0x4, scoped, tag = 'scoped memory for tpu_custom_call.1']
    #allocation5 [shape = 's32[1]{0}', space=sflag, size = 0x4, scoped, tag = 'scoped memory for tpu_custom_call.1']
    #allocation6 [shape = 's32[1]{0}', space=sflag, size = 0x4, scoped, tag = 'scoped memory for tpu_custom_call.1']
    #allocation7 [shape = 'u8[512]{0}', space=smem, size = 0x200, scoped, tag = 'input window, operand 1, single buffered']
    #allocation8 [shape = 'u8[8192]{0}', space=vmem, size = 0x2000, scoped, tag = 'output window, operand 0, single buffered']
    %8 = vsyncpa [#allocation5], 0
    %9 = vsyncpa [#allocation6], 0
    %10 = vsyncpa [#allocation4], 0
    // Predicated region
    $region2: #{tpu_custom_call.1} parent=1 // pred_check
      _
    $region3: #{tpu_custom_call.1} parent=1 // pred_check_branch
      %12 = sbr.rel (0) target = $region5
    $region4: #{tpu_custom_call.1} parent=1 // pred_region
      %s14 = ssub.s32 16, 16
      %15 = vsyncadd [#allocation5], %s14
      %18 = dma.hbm_to_smem %s0, 16, [#allocation3], [#allocation5]
    $region5: #{tpu_custom_call.1} parent=1 // pred_fallthru
      _
    // Predicated region
    $region6: #{tpu_custom_call.1} parent=1 // pred_check
      _
    $region7: #{tpu_custom_call.1} parent=1 // pred_check_branch
      %20 = sbr.rel (0) target = $region9
    $region8: #{tpu_custom_call.1} parent=1 // pred_region
      %s22 = ssub.s32 16, 16
      %23 = vsyncadd [#allocation6], %s22
      %s25 = sshll.u32 %s1, 4
      %s26 = int_to_ptr.vmem [resolvable:$true] %s25
      %28 = dma.vmem_to_smem %s26, 16, [#allocation7], [#allocation6]
    $region9: #{tpu_custom_call.1} parent=1 // pred_fallthru
      _
    // Predicated region
    $region10: #{tpu_custom_call.1} parent=1 // pred_check
      _
    $region11: #{tpu_custom_call.1} parent=1 // pred_check_branch
      %30 = sbr.rel (0) target = $region13
    $region12: #{tpu_custom_call.1} parent=1 // pred_region
      _
    $region13: #{tpu_custom_call.1} parent=1 // pred_fallthru
      _
    // Predicated region
    $region14: #{tpu_custom_call.1} parent=1 // pred_check
      _
    $region15: #{tpu_custom_call.1} parent=1 // pred_check_branch
      %32 = sbr.rel (0) target = $region17
    $region16: #{tpu_custom_call.1} parent=1 // pred_region
      %33 = dma.done [#allocation5], 16
    $region17: #{tpu_custom_call.1} parent=1 // pred_fallthru
      _
    // Predicated region
    $region18: #{tpu_custom_call.1} parent=1 // pred_check
      _
    $region19: #{tpu_custom_call.1} parent=1 // pred_check_branch
      %35 = sbr.rel (0) target = $region21
    $region20: #{tpu_custom_call.1} parent=1 // pred_region
      %36 = dma.done [#allocation6], 16
    $region21: #{tpu_custom_call.1} parent=1 // pred_fallthru
      _
    %37 = sfence
    %p38 = scmp.eq.s32.totalorder 0, 0
    // Predicated region
    $region22: #{tpu_custom_call.1} parent=1 // pred_check
      %p39 = pneg %p38
    $region23: #{tpu_custom_call.1} parent=1 // pred_check_branch
      %41 = sbr.rel (%p39) target = $region25
    $region24: #{tpu_custom_call.1} parent=1 // pred_region
      %v42 = vld [vmem:[%s2] sm:$0x3]
      %43 = vst [vmem:[#allocation2] sm:$0x3] %v42
    $region25: #{tpu_custom_call.1} parent=1 // pred_fallthru
      _
    %s44 = sld [smem:[#allocation7]]
    %s45 = sld [smem:[#allocation7 + $0x1]]
    %s46 = sld [smem:[#allocation7 + $0x2]]
    %s47 = sld [smem:[#allocation7 + $0x3]]
    %s48 = sld [smem:[#allocation7 + $0x4]]
    %s49 = sld [smem:[#allocation7 + $0x5]]
    %s50 = sld [smem:[#allocation7 + $0x6]]
    %s51 = sld [smem:[#allocation7 + $0x7]]
    %s52 = sld [smem:[#allocation7 + $0x8]]
    %s53 = sld [smem:[#allocation7 + $0x9]]
    %v54 = vlaneseq
    %v55 = vand.u32 %v54, 127
    %vm56 = vcmp.eq.s32.totalorder %v55, 0
    %vm57 = vcmp.eq.s32.totalorder %v55, 15
    %vm58 = vcmp.lt.s32.totalorder %v55, 16
    %s59 = sadd.f32 %s45, %s47
    %v60 = vstv %s45
    %v61 = vstv %s59
    %v62 = vsel %vm57, %v60, %v61
    %v63 = vsel %vm58, %v62, 0.0
    %vm64 = vmxor %vm56, 1
    %vm65 = vmand %vm58, %vm64
    %v66 = vstv %s46
    %v67 = vsel %vm65, %v66, 0.0
    %vm68 = vmxor %vm57, 1
    %vm69 = vmand %vm58, %vm68
    %v70 = vstv %s48
    %v71 = vsel %vm69, %v70, 0.0
    %s72 = smul.f32 %s46, %s44
    %v73 = vstv %s72
    %v74 = vsel %vm56, %v73, 0.0
    %v75 = vstv %s49
    %v76 = vsel %vm58, %v75, 0.0
    %v77 = vstv %s51
    %v78 = vsel %vm58, %v77, 0.0
    %v79 = vstv %s50
    %v80 = vstv %s52
    %v81 = vld [vmem:[#allocation2] sm:$0x1]
    %v82 = vld [vmem:[#allocation2 + $0x1] sm:$0x1]
    %s83 = smul.u32 0, 8
    %84 = vst [vmem:[#allocation8] sm:$0x1] %v81
    %s85 = scalar_lea.vmem [#allocation8], 8
    %86 = vst [vmem:[%s85] sm:$0x1] %v82
    %s87 = sld [smem:[#allocation3 + %s83]]
    %88 = vrot.lane.b32.xlu0 %v81, 1
    %v89 = vpop.permute.xlu0 %88
    %90 = vrot.lane.b32.xlu0 %v81, 127
    %v91 = vpop.permute.xlu0 %90
    %v92 = vmul.f32 %v63, %v81
    %v93 = vmul.f32 %v67, %v89
    %v94 = vadd.f32 %v92, %v93
    %v95 = vmul.f32 %v71, %v91
    %v96 = vadd.f32 %v94, %v95
    %v97 = vadd.f32 %v96, %v74
    %v98 = vlog2.pop %v81
    %v99 = vmul.f32 %v98, 0.6931472
    %v100 = vstv %s53
    %v101 = vmul.f32 %v100, %v99
    %v102 = vmul.f32 %v101, 1.442695
    %v103 = vpow.pop %v102
    %v104 = vmul.f32 %v76, %v103
    %v105 = vmul.f32 %v78, %v82
    %v106 = vmul.f32 %v104, %v81
    %v107 = vadd.f32 %v106, %v105
    %v108 = vmul.f32 %v79, %v103
    %v109 = vadd.f32 %v108, 1.0
    %v110 = vrcp.pop %v109
    %v111 = vmul.f32 %v109, %v110
    %v112 = vsub.f32 2.0, %v111
    %v113 = vmul.f32 %v110, %v112
    %v114 = vadd.f32 %v97, %v107
    %v115 = vmul.f32 %v114, %v113
    %v116 = vsub.f32 0.0, %v107
    %v117 = vmul.f32 %v116, %v80
    %v118 = vstv %s87
    %v119 = vmul.f32 %v118, %v115
    %v120 = vadd.f32 %v81, %v119
    %v121 = vmul.f32 %v118, %v117
    %v122 = vadd.f32 %v82, %v121
    %123 = vst [vmem:[#allocation8 + $0x1] sm:$0x1] %v120
    %124 = vst [vmem:[%s85 + $0x1] sm:$0x1] %v122
    %s125 = sadd.s32 %s83, 1
    %s126 = sld [smem:[#allocation3 + %s125]]
    %127 = vrot.lane.b32.xlu0 %v120, 1
    %v128 = vpop.permute.xlu0 %127
    %129 = vrot.lane.b32.xlu0 %v120, 127
    %v130 = vpop.permute.xlu0 %129
    %v131 = vmul.f32 %v63, %v120
    %v132 = vmul.f32 %v67, %v128
    %v133 = vadd.f32 %v131, %v132
    %v134 = vmul.f32 %v71, %v130
    %v135 = vadd.f32 %v133, %v134
    %v136 = vadd.f32 %v135, %v74
    %v137 = vlog2.pop %v120
    %v138 = vmul.f32 %v137, 0.6931472
    %v139 = vmul.f32 %v100, %v138
    %v140 = vmul.f32 %v139, 1.442695
    %v141 = vpow.pop %v140
    %v142 = vmul.f32 %v76, %v141
    %v143 = vmul.f32 %v78, %v122
    %v144 = vmul.f32 %v142, %v120
    %v145 = vadd.f32 %v144, %v143
    %v146 = vmul.f32 %v79, %v141
    %v147 = vadd.f32 %v146, 1.0
    %v148 = vrcp.pop %v147
    %v149 = vmul.f32 %v147, %v148
    %v150 = vsub.f32 2.0, %v149
    %v151 = vmul.f32 %v148, %v150
    %v152 = vadd.f32 %v136, %v145
    %v153 = vmul.f32 %v152, %v151
    %v154 = vsub.f32 0.0, %v145
    %v155 = vmul.f32 %v154, %v80
    %v156 = vstv %s126
    %v157 = vmul.f32 %v156, %v153
    %v158 = vadd.f32 %v120, %v157
    %v159 = vmul.f32 %v156, %v155
    %v160 = vadd.f32 %v122, %v159
    %161 = vst [vmem:[#allocation8 + $0x2] sm:$0x1] %v158
    %162 = vst [vmem:[%s85 + $0x2] sm:$0x1] %v160
    %s163 = sadd.s32 %s83, 2
    %s164 = sld [smem:[#allocation3 + %s163]]
    %165 = vrot.lane.b32.xlu0 %v158, 1
    %v166 = vpop.permute.xlu0 %165
    %167 = vrot.lane.b32.xlu0 %v158, 127
    %v168 = vpop.permute.xlu0 %167
    %v169 = vmul.f32 %v63, %v158
    %v170 = vmul.f32 %v67, %v166
    %v171 = vadd.f32 %v169, %v170
    %v172 = vmul.f32 %v71, %v168
    %v173 = vadd.f32 %v171, %v172
    %v174 = vadd.f32 %v173, %v74
    %v175 = vlog2.pop %v158
    %v176 = vmul.f32 %v175, 0.6931472
    %v177 = vmul.f32 %v100, %v176
    %v178 = vmul.f32 %v177, 1.442695
    %v179 = vpow.pop %v178
    %v180 = vmul.f32 %v76, %v179
    %v181 = vmul.f32 %v78, %v160
    %v182 = vmul.f32 %v180, %v158
    %v183 = vadd.f32 %v182, %v181
    %v184 = vmul.f32 %v79, %v179
    %v185 = vadd.f32 %v184, 1.0
    %v186 = vrcp.pop %v185
    %v187 = vmul.f32 %v185, %v186
    %v188 = vsub.f32 2.0, %v187
    %v189 = vmul.f32 %v186, %v188
    %v190 = vadd.f32 %v174, %v183
    %v191 = vmul.f32 %v190, %v189
    %v192 = vsub.f32 0.0, %v183
    %v193 = vmul.f32 %v192, %v80
    %v194 = vstv %s164
    %v195 = vmul.f32 %v194, %v191
    %v196 = vadd.f32 %v158, %v195
    %v197 = vmul.f32 %v194, %v193
    %v198 = vadd.f32 %v160, %v197
    %199 = vst [vmem:[#allocation8 + $0x3] sm:$0x1] %v196
    %200 = vst [vmem:[%s85 + $0x3] sm:$0x1] %v198
    %s201 = sadd.s32 %s83, 3
    %s202 = sld [smem:[#allocation3 + %s201]]
    %203 = vrot.lane.b32.xlu0 %v196, 1
    %v204 = vpop.permute.xlu0 %203
    %205 = vrot.lane.b32.xlu0 %v196, 127
    %v206 = vpop.permute.xlu0 %205
    %v207 = vmul.f32 %v63, %v196
    %v208 = vmul.f32 %v67, %v204
    %v209 = vadd.f32 %v207, %v208
    %v210 = vmul.f32 %v71, %v206
    %v211 = vadd.f32 %v209, %v210
    %v212 = vadd.f32 %v211, %v74
    %v213 = vlog2.pop %v196
    %v214 = vmul.f32 %v213, 0.6931472
    %v215 = vmul.f32 %v100, %v214
    %v216 = vmul.f32 %v215, 1.442695
    %v217 = vpow.pop %v216
    %v218 = vmul.f32 %v76, %v217
    %v219 = vmul.f32 %v78, %v198
    %v220 = vmul.f32 %v218, %v196
    %v221 = vadd.f32 %v220, %v219
    %v222 = vmul.f32 %v79, %v217
    %v223 = vadd.f32 %v222, 1.0
    %v224 = vrcp.pop %v223
    %v225 = vmul.f32 %v223, %v224
    %v226 = vsub.f32 2.0, %v225
    %v227 = vmul.f32 %v224, %v226
    %v228 = vadd.f32 %v212, %v221
    %v229 = vmul.f32 %v228, %v227
    %v230 = vsub.f32 0.0, %v221
    %v231 = vmul.f32 %v230, %v80
    %v232 = vstv %s202
    %v233 = vmul.f32 %v232, %v229
    %v234 = vadd.f32 %v196, %v233
    %v235 = vmul.f32 %v232, %v231
    %v236 = vadd.f32 %v198, %v235
    %237 = vst [vmem:[#allocation8 + $0x4] sm:$0x1] %v234
    %238 = vst [vmem:[%s85 + $0x4] sm:$0x1] %v236
    %s239 = sadd.s32 %s83, 4
    %s240 = sld [smem:[#allocation3 + %s239]]
    %241 = vrot.lane.b32.xlu0 %v234, 1
    %v242 = vpop.permute.xlu0 %241
    %243 = vrot.lane.b32.xlu0 %v234, 127
    %v244 = vpop.permute.xlu0 %243
    %v245 = vmul.f32 %v63, %v234
    %v246 = vmul.f32 %v67, %v242
    %v247 = vadd.f32 %v245, %v246
    %v248 = vmul.f32 %v71, %v244
    %v249 = vadd.f32 %v247, %v248
    %v250 = vadd.f32 %v249, %v74
    %v251 = vlog2.pop %v234
    %v252 = vmul.f32 %v251, 0.6931472
    %v253 = vmul.f32 %v100, %v252
    %v254 = vmul.f32 %v253, 1.442695
    %v255 = vpow.pop %v254
    %v256 = vmul.f32 %v76, %v255
    %v257 = vmul.f32 %v78, %v236
    %v258 = vmul.f32 %v256, %v234
    %v259 = vadd.f32 %v258, %v257
    %v260 = vmul.f32 %v79, %v255
    %v261 = vadd.f32 %v260, 1.0
    %v262 = vrcp.pop %v261
    %v263 = vmul.f32 %v261, %v262
    %v264 = vsub.f32 2.0, %v263
    %v265 = vmul.f32 %v262, %v264
    %v266 = vadd.f32 %v250, %v259
    %v267 = vmul.f32 %v266, %v265
    %v268 = vsub.f32 0.0, %v259
    %v269 = vmul.f32 %v268, %v80
    %v270 = vstv %s240
    %v271 = vmul.f32 %v270, %v267
    %v272 = vadd.f32 %v234, %v271
    %v273 = vmul.f32 %v270, %v269
    %v274 = vadd.f32 %v236, %v273
    %275 = vst [vmem:[#allocation8 + $0x5] sm:$0x1] %v272
    %276 = vst [vmem:[%s85 + $0x5] sm:$0x1] %v274
    %s277 = sadd.s32 %s83, 5
    %s278 = sld [smem:[#allocation3 + %s277]]
    %279 = vrot.lane.b32.xlu0 %v272, 1
    %v280 = vpop.permute.xlu0 %279
    %281 = vrot.lane.b32.xlu0 %v272, 127
    %v282 = vpop.permute.xlu0 %281
    %v283 = vmul.f32 %v63, %v272
    %v284 = vmul.f32 %v67, %v280
    %v285 = vadd.f32 %v283, %v284
    %v286 = vmul.f32 %v71, %v282
    %v287 = vadd.f32 %v285, %v286
    %v288 = vadd.f32 %v287, %v74
    %v289 = vlog2.pop %v272
    %v290 = vmul.f32 %v289, 0.6931472
    %v291 = vmul.f32 %v100, %v290
    %v292 = vmul.f32 %v291, 1.442695
    %v293 = vpow.pop %v292
    %v294 = vmul.f32 %v76, %v293
    %v295 = vmul.f32 %v78, %v274
    %v296 = vmul.f32 %v294, %v272
    %v297 = vadd.f32 %v296, %v295
    %v298 = vmul.f32 %v79, %v293
    %v299 = vadd.f32 %v298, 1.0
    %v300 = vrcp.pop %v299
    %v301 = vmul.f32 %v299, %v300
    %v302 = vsub.f32 2.0, %v301
    %v303 = vmul.f32 %v300, %v302
    %v304 = vadd.f32 %v288, %v297
    %v305 = vmul.f32 %v304, %v303
    %v306 = vsub.f32 0.0, %v297
    %v307 = vmul.f32 %v306, %v80
    %v308 = vstv %s278
    %v309 = vmul.f32 %v308, %v305
    %v310 = vadd.f32 %v272, %v309
    %v311 = vmul.f32 %v308, %v307
    %v312 = vadd.f32 %v274, %v311
    %313 = vst [vmem:[#allocation8 + $0x6] sm:$0x1] %v310
    %314 = vst [vmem:[%s85 + $0x6] sm:$0x1] %v312
    %s315 = sadd.s32 %s83, 6
    %s316 = sld [smem:[#allocation3 + %s315]]
    %317 = vrot.lane.b32.xlu0 %v310, 1
    %v318 = vpop.permute.xlu0 %317
    %319 = vrot.lane.b32.xlu0 %v310, 127
    %v320 = vpop.permute.xlu0 %319
    %v321 = vmul.f32 %v63, %v310
    %v322 = vmul.f32 %v67, %v318
    %v323 = vadd.f32 %v321, %v322
    %v324 = vmul.f32 %v71, %v320
    %v325 = vadd.f32 %v323, %v324
    %v326 = vadd.f32 %v325, %v74
    %v327 = vlog2.pop %v310
    %v328 = vmul.f32 %v327, 0.6931472
    %v329 = vmul.f32 %v100, %v328
    %v330 = vmul.f32 %v329, 1.442695
    %v331 = vpow.pop %v330
    %v332 = vmul.f32 %v76, %v331
    %v333 = vmul.f32 %v78, %v312
    %v334 = vmul.f32 %v332, %v310
    %v335 = vadd.f32 %v334, %v333
    %v336 = vmul.f32 %v79, %v331
    %v337 = vadd.f32 %v336, 1.0
    %v338 = vrcp.pop %v337
    %v339 = vmul.f32 %v337, %v338
    %v340 = vsub.f32 2.0, %v339
    %v341 = vmul.f32 %v338, %v340
    %v342 = vadd.f32 %v326, %v335
    %v343 = vmul.f32 %v342, %v341
    %v344 = vsub.f32 0.0, %v335
    %v345 = vmul.f32 %v344, %v80
    %v346 = vstv %s316
    %v347 = vmul.f32 %v346, %v343
    %v348 = vadd.f32 %v310, %v347
    %v349 = vmul.f32 %v346, %v345
    %v350 = vadd.f32 %v312, %v349
    %351 = vst [vmem:[#allocation8 + $0x7] sm:$0x1] %v348
    %352 = vst [vmem:[%s85 + $0x7] sm:$0x1] %v350
    %s353 = sadd.s32 %s83, 7
    %s354 = sld [smem:[#allocation3 + %s353]]
    %355 = vrot.lane.b32.xlu0 %v348, 1
    %v356 = vpop.permute.xlu0 %355
    %357 = vrot.lane.b32.xlu0 %v348, 127
    %v358 = vpop.permute.xlu0 %357
    %v359 = vmul.f32 %v63, %v348
    %v360 = vmul.f32 %v67, %v356
    %v361 = vadd.f32 %v359, %v360
    %v362 = vmul.f32 %v71, %v358
    %v363 = vadd.f32 %v361, %v362
    %v364 = vadd.f32 %v363, %v74
    %v365 = vlog2.pop %v348
    %v366 = vmul.f32 %v365, 0.6931472
    %v367 = vmul.f32 %v100, %v366
    %v368 = vmul.f32 %v367, 1.442695
    %v369 = vpow.pop %v368
    %v370 = vmul.f32 %v76, %v369
    %v371 = vmul.f32 %v78, %v350
    %v372 = vmul.f32 %v370, %v348
    %v373 = vadd.f32 %v372, %v371
    %v374 = vmul.f32 %v79, %v369
    %v375 = vadd.f32 %v374, 1.0
    %v376 = vrcp.pop %v375
    %v377 = vmul.f32 %v375, %v376
    %v378 = vsub.f32 2.0, %v377
    %v379 = vmul.f32 %v376, %v378
    %v380 = vadd.f32 %v364, %v373
    %v381 = vmul.f32 %v380, %v379
    %v382 = vsub.f32 0.0, %v373
    %v383 = vmul.f32 %v382, %v80
    %v384 = vstv %s354
    %v385 = vmul.f32 %v384, %v381
    %v386 = vadd.f32 %v348, %v385
    %v387 = vmul.f32 %v384, %v383
    %v388 = vadd.f32 %v350, %v387
    %389 = vst [vmem:[#allocation2] sm:$0x1] %v386
    %390 = vst [vmem:[#allocation2 + $0x1] sm:$0x1] %v388
    // Predicated region
    $region26: #{tpu_custom_call.1} parent=1 // pred_check
      _
    $region27: #{tpu_custom_call.1} parent=1 // pred_check_branch
      %392 = sbr.rel (0) target = $region29
    $region28: #{tpu_custom_call.1} parent=1 // pred_region
      %s394 = ssub.s32 256, 256
      %395 = vsyncadd [#allocation4], %s394
      %s396 = sshll.u32 [#allocation8], 4
      %s397 = int_to_ptr.vmem [resolvable:$true] %s396
      %402 = dma.vmem_to_hbm [thread:$0]  %s397, 256, %s3, [#allocation4], 128, 128, 8
    $region29: #{tpu_custom_call.1} parent=1 // pred_fallthru
      _
    // Predicated region
    $region30: #{tpu_custom_call.1} parent=1 // pred_check
      _
    $region31: #{tpu_custom_call.1} parent=1 // pred_check_branch
      %404 = sbr.rel (0) target = $region33
    $region32: #{tpu_custom_call.1} parent=1 // pred_region
      %405 = dma.done [#allocation4], 256
    $region33: #{tpu_custom_call.1} parent=1 // pred_fallthru
      _
    %406 = vsyncpa [#allocation4], 1
    %407 = vsyncpa [#allocation5], 1
    %408 = vsyncpa [#allocation6], 1

</llo_original>
